<compile_context>
chip_gen: v6e
topology: v6e:2x2x1
jax: 0.10.0
libtpu: 0.0.40
codegen_flags: <defaults>
</compile_context>

<pallas_src>
import jax
import jax.numpy as jnp
from jax.experimental import pallas as pl
from jax.experimental.pallas import tpu as pltpu

SUBLANE = 8


def _round_up(x, m):
    return ((x + m - 1) // m) * m


def _num_tensorcores():
    """Best-effort detection of TensorCores per chip (2 on v7x, else 1)."""
    try:
        kind = (getattr(jax.devices()[0], "device_kind", "") or "").lower()
        if "v7" in kind:
            return 2
    except Exception:
        pass
    return 1


def qnet_kernel(x_ref, w1_ref, b1_ref, w2_ref, b2_ref, w3_ref, b3_ref, q_ref):
    # Hidden layer 1: Linear + ReLU (f32 MXU accumulate, f32 VPU elementwise)
    h = jnp.dot(x_ref[...], w1_ref[...], preferred_element_type=jnp.float32)
    h = jnp.maximum(h + b1_ref[...], 0.0)
    # Hidden layer 2: Linear + ReLU
    h = jnp.dot(h, w2_ref[...], preferred_element_type=jnp.float32)
    h = jnp.maximum(h + b2_ref[...], 0.0)
    # Output layer: Linear (no activation) -> Q(s, a); only 8 output columns,
    # masked vst is fine (kernel is HBM-bound, store-slot cost is hidden).
    q = jnp.dot(h, w3_ref[...], preferred_element_type=jnp.float32)
    q_ref[...] = (q + b3_ref[...]).astype(q_ref.dtype)


def qnet_forward(obs, params, *, vmem_limit_bytes=32 * 1024 * 1024):
    """obs: [B, obs_dim] float32. params: dict of w1,b1,w2,b2,w3,b3 ([in,out] layout)."""
    B, obs_dim = obs.shape
    h0 = params["w1"].shape[1]
    h1 = params["w2"].shape[1]
    act_num = params["w3"].shape[1]

    # --- narrow output: pad final-layer columns only up to a multiple of 8
    # (block last dim == full array dim -> legal BlockSpec; no 128-lane HBM padding).
    n_out = _round_up(act_num, SUBLANE)
    w3p = jnp.pad(params["w3"], ((0, 0), (0, n_out - act_num)))
    b3p = jnp.pad(params["b3"], ((0, 0), (0, n_out - act_num)))

    # --- grid-step count: 1 step normally; 2 half-batch steps on v7x for large
    # batches so the "parallel" batch axis actually feeds both TensorCores.
    b8 = _round_up(B, SUBLANE)
    n_tc = _num_tensorcores()
    n_steps = 2 if (n_tc == 2 and b8 >= 1024) else 1

    # --- VMEM budget -> cap on the batch tile (double-buffered in/out tiles,
    # intermediate activations, plus resident weights; leave headroom).
    weight_bytes = 4 * (params["w1"].size + params["b1"].size +
                        params["w2"].size + params["b2"].size +
                        w3p.size + b3p.size)
    per_row_bytes = 4 * (2 * (obs_dim + n_out) + h0 + h1 + n_out)
    budget = max(int(vmem_limit_bytes * 0.6) - weight_bytes, per_row_bytes * SUBLANE)
    tb_cap = max(SUBLANE, (budget // per_row_bytes) // SUBLANE * SUBLANE)

    tb = _round_up(-(-b8 // n_steps), SUBLANE)   # ceil-div, sublane aligned
    tb = min(tb, tb_cap)

    b_pad = _round_up(B, tb)
    if b_pad != B:
        obs = jnp.pad(obs, ((0, b_pad - B), (0, 0)))
    grid = (b_pad // tb,)

    def const_spec(shape):
        # Weights/biases: whole-array block, same block index every grid step
        # -> stay resident in VMEM (no per-step DMA).
        return pl.BlockSpec(shape, lambda i: (0, 0))

    q_pad = pl.pallas_call(
        qnet_kernel,
        out_shape=jax.ShapeDtypeStruct((b_pad, n_out), jnp.float32),
        grid=grid,
        in_specs=[
            pl.BlockSpec((tb, obs_dim), lambda i: (i, 0)),  # streamed obs tile
            const_spec(params["w1"].shape),
            const_spec(params["b1"].shape),
            const_spec(params["w2"].shape),
            const_spec(params["b2"].shape),
            const_spec(w3p.shape),
            const_spec(b3p.shape),
        ],
        out_specs=pl.BlockSpec((tb, n_out), lambda i: (i, 0)),
        compiler_params=pltpu.CompilerParams(
            dimension_semantics=("parallel",),
            vmem_limit_bytes=vmem_limit_bytes),
    )(obs, params["w1"], params["b1"], params["w2"], params["b2"], w3p, b3p)

    # Drop batch padding rows and the few padding columns (argmax semantics kept).
    return q_pad[:B, :act_num]


def init_qnet_params(key, obs_dim, act_num, hidden_size):
    """Deterministic synthetic init (uniform fan-in scaling, like torch Linear)."""
    dims = [obs_dim] + list(hidden_size) + [act_num]
    params = {}
    for i, (d_in, d_out) in enumerate(zip(dims[:-1], dims[1:]), start=1):
        key, kw, kb = jax.random.split(key, 3)
        bound = 1.0 / jnp.sqrt(jnp.asarray(d_in, jnp.float32))
        # store as [in, out] so kernel does x @ W
        params[f"w{i}"] = jax.random.uniform(
            kw, (d_in, d_out), jnp.float32, -bound, bound)
        # keep bias 2D [1, out] for clean TPU layout / broadcasting
        params[f"b{i}"] = jax.random.uniform(
            kb, (1, d_out), jnp.float32, -bound, bound)
    return params


def qnet_reference(obs, params):
    """Plain-JAX reference matching the PyTorch MLP forward."""
    h = jnp.maximum(obs @ params["w1"] + params["b1"], 0.0)
    h = jnp.maximum(h @ params["w2"] + params["b2"], 0.0)
    return h @ params["w3"] + params["b3"]


if __name__ == "__main__":
    obs_dim, act_num = 16, 4
    hidden_size = (32, 32)

    key = jax.random.PRNGKey(0)
    key, k_obs_small, k_obs_big = jax.random.split(key, 3)
    params = init_qnet_params(key, obs_dim, act_num, hidden_size)

    # Case 1: toy inference batch (B=8), single grid step.
    B = 8
    obs = jax.random.normal(k_obs_small, (B, obs_dim), jnp.float32)
    q = jax.block_until_ready(qnet_forward(obs, params))
    q_ref = qnet_reference(obs, params)
    assert q.shape == (B, act_num), q.shape
    assert jnp.allclose(q, q_ref, atol=1e-5, rtol=1e-5), (
        "Pallas kernel output mismatch vs JAX reference (B=8)")

    # Case 2: training-style batch, non-multiple of 8 -> exercises batch
    # padding; whole batch handled in one (or two, on v7x-sized batches)
    # grid steps with resident weights.
    B2 = 300
    obs2 = jax.random.normal(k_obs_big, (B2, obs_dim), jnp.float32)
    q2 = jax.block_until_ready(qnet_forward(obs2, params))
    q2_ref = qnet_reference(obs2, params)
    assert q2.shape == (B2, act_num), q2.shape
    assert jnp.allclose(q2, q2_ref, atol=1e-5, rtol=1e-5), (
        "Pallas kernel output mismatch vs JAX reference (B=300)")

    print("KERNEL_OK")
</pallas_src>

<mosaic_0001>
module attributes {stable_mosaic.version = 11 : i64} {
  func.func @qnet_kernel(%arg0: i32, %arg1: memref<8x16xf32, #tpu.memory_space<vmem>>, %arg2: memref<16x32xf32, #tpu.memory_space<vmem>>, %arg3: memref<1x32xf32, #tpu.memory_space<vmem>>, %arg4: memref<32x32xf32, #tpu.memory_space<vmem>>, %arg5: memref<1x32xf32, #tpu.memory_space<vmem>>, %arg6: memref<32x8xf32, #tpu.memory_space<vmem>>, %arg7: memref<1x8xf32, #tpu.memory_space<vmem>>, %arg8: memref<8x8xf32, #tpu.memory_space<vmem>>) attributes {dimension_semantics = [#tpu.dimension_semantics<parallel>], iteration_bounds = array<i64: 1>, scalar_prefetch = 0 : i64, scratch_operands = 0 : i64, tpu.core_type = #tpu.core_type<tc>, window_params = [{transform_indices = @transform_0, window_bounds = array<i64: 8, 16>}, {pipeline_mode = #tpu.pipeline_mode<synchronous>, transform_indices = @transform_1, window_bounds = array<i64: 16, 32>}, {pipeline_mode = #tpu.pipeline_mode<synchronous>, transform_indices = @transform_2, window_bounds = array<i64: 1, 32>}, {pipeline_mode = #tpu.pipeline_mode<synchronous>, transform_indices = @transform_3, window_bounds = array<i64: 32, 32>}, {pipeline_mode = #tpu.pipeline_mode<synchronous>, transform_indices = @transform_4, window_bounds = array<i64: 1, 32>}, {pipeline_mode = #tpu.pipeline_mode<synchronous>, transform_indices = @transform_5, window_bounds = array<i64: 32, 8>}, {pipeline_mode = #tpu.pipeline_mode<synchronous>, transform_indices = @transform_6, window_bounds = array<i64: 1, 8>}, {transform_indices = @transform_7, window_bounds = array<i64: 8, 8>}]} {
    %c0 = arith.constant 0 : index
    %c0_0 = arith.constant 0 : index
    %0 = vector.load %arg1[%c0, %c0_0] : memref<8x16xf32, #tpu.memory_space<vmem>>, vector<8x16xf32>
    %c0_1 = arith.constant 0 : index
    %c0_2 = arith.constant 0 : index
    %1 = vector.load %arg2[%c0_1, %c0_2] : memref<16x32xf32, #tpu.memory_space<vmem>>, vector<16x32xf32>
    %cst = arith.constant dense<0.000000e+00> : vector<8x32xf32>
    %2 = tpu.matmul %0, %1, %cst {dimension_numbers = #tpu.dot_dimension_numbers<[1], [0], [0], [1], [0, 0, 1, 1], [], []>} : vector<8x16xf32>, vector<16x32xf32>, vector<8x32xf32> -> vector<8x32xf32>
    %c0_3 = arith.constant 0 : index
    %c0_4 = arith.constant 0 : index
    %3 = vector.load %arg3[%c0_3, %c0_4] : memref<1x32xf32, #tpu.memory_space<vmem>>, vector<1x32xf32>
    %4 = vector.broadcast %3 : vector<1x32xf32> to vector<8x32xf32>
    %5 = arith.addf %2, %4 : vector<8x32xf32>
    %cst_5 = arith.constant 0.000000e+00 : f32
    %6 = vector.broadcast %cst_5 : f32 to vector<8x32xf32>
    %7 = arith.maximumf %5, %6 : vector<8x32xf32>
    %c0_6 = arith.constant 0 : index
    %c0_7 = arith.constant 0 : index
    %8 = vector.load %arg4[%c0_6, %c0_7] : memref<32x32xf32, #tpu.memory_space<vmem>>, vector<32x32xf32>
    %cst_8 = arith.constant dense<0.000000e+00> : vector<8x32xf32>
    %9 = tpu.matmul %7, %8, %cst_8 {dimension_numbers = #tpu.dot_dimension_numbers<[1], [0], [0], [1], [0, 0, 1, 1], [], []>} : vector<8x32xf32>, vector<32x32xf32>, vector<8x32xf32> -> vector<8x32xf32>
    %c0_9 = arith.constant 0 : index
    %c0_10 = arith.constant 0 : index
    %10 = vector.load %arg5[%c0_9, %c0_10] : memref<1x32xf32, #tpu.memory_space<vmem>>, vector<1x32xf32>
    %11 = vector.broadcast %10 : vector<1x32xf32> to vector<8x32xf32>
    %12 = arith.addf %9, %11 : vector<8x32xf32>
    %cst_11 = arith.constant 0.000000e+00 : f32
    %13 = vector.broadcast %cst_11 : f32 to vector<8x32xf32>
    %14 = arith.maximumf %12, %13 : vector<8x32xf32>
    %c0_12 = arith.constant 0 : index
    %c0_13 = arith.constant 0 : index
    %15 = vector.load %arg6[%c0_12, %c0_13] : memref<32x8xf32, #tpu.memory_space<vmem>>, vector<32x8xf32>
    %cst_14 = arith.constant dense<0.000000e+00> : vector<8x8xf32>
    %16 = tpu.matmul %14, %15, %cst_14 {dimension_numbers = #tpu.dot_dimension_numbers<[1], [0], [0], [1], [0, 0, 1, 1], [], []>} : vector<8x32xf32>, vector<32x8xf32>, vector<8x8xf32> -> vector<8x8xf32>
    %c0_15 = arith.constant 0 : index
    %c0_16 = arith.constant 0 : index
    %17 = vector.load %arg7[%c0_15, %c0_16] : memref<1x8xf32, #tpu.memory_space<vmem>>, vector<1x8xf32>
    %18 = vector.broadcast %17 : vector<1x8xf32> to vector<8x8xf32>
    %19 = arith.addf %16, %18 : vector<8x8xf32>
    %c0_17 = arith.constant 0 : index
    %c0_18 = arith.constant 0 : index
    %20 = vector.load %arg8[%c0_17, %c0_18] : memref<8x8xf32, #tpu.memory_space<vmem>>, vector<8x8xf32>
    tpu.vector_store %arg8[%c0_17, %c0_18], %19 {strides = array<i32>} : memref<8x8xf32, #tpu.memory_space<vmem>>, vector<8x8xf32>,
    return
  }
  func.func @transform_0(%arg0: i32) -> (i32, i32) {
    %c0_i32 = arith.constant 0 : i32
    %c0_i32_0 = arith.constant 0 : i32
    return %arg0, %c0_i32 : i32, i32
  }
  func.func @transform_1(%arg0: i32) -> (i32, i32) {
    %c0_i32 = arith.constant 0 : i32
    %c0_i32_0 = arith.constant 0 : i32
    %c0_i32_1 = arith.constant 0 : i32
    return %c0_i32, %c0_i32_0 : i32, i32
  }
  func.func @transform_2(%arg0: i32) -> (i32, i32) {
    %c0_i32 = arith.constant 0 : i32
    %c0_i32_0 = arith.constant 0 : i32
    %c0_i32_1 = arith.constant 0 : i32
    return %c0_i32, %c0_i32_0 : i32, i32
  }
  func.func @transform_3(%arg0: i32) -> (i32, i32) {
    %c0_i32 = arith.constant 0 : i32
    %c0_i32_0 = arith.constant 0 : i32
    %c0_i32_1 = arith.constant 0 : i32
    return %c0_i32, %c0_i32_0 : i32, i32
  }
  func.func @transform_4(%arg0: i32) -> (i32, i32) {
    %c0_i32 = arith.constant 0 : i32
    %c0_i32_0 = arith.constant 0 : i32
    %c0_i32_1 = arith.constant 0 : i32
    return %c0_i32, %c0_i32_0 : i32, i32
  }
  func.func @transform_5(%arg0: i32) -> (i32, i32) {
    %c0_i32 = arith.constant 0 : i32
    %c0_i32_0 = arith.constant 0 : i32
    %c0_i32_1 = arith.constant 0 : i32
    return %c0_i32, %c0_i32_0 : i32, i32
  }
  func.func @transform_6(%arg0: i32) -> (i32, i32) {
    %c0_i32 = arith.constant 0 : i32
    %c0_i32_0 = arith.constant 0 : i32
    %c0_i32_1 = arith.constant 0 : i32
    return %c0_i32, %c0_i32_0 : i32, i32
  }
  func.func @transform_7(%arg0: i32) -> (i32, i32) {
    %c0_i32 = arith.constant 0 : i32
    %c0_i32_0 = arith.constant 0 : i32
    return %arg0, %c0_i32 : i32, i32
  }
}

</mosaic_0001>

<llo_original>
// kernel: tpu_custom_call.1
$region0: #{tpu_custom_call.1}
  #allocation0 [shape = 'u32[]', space=smem, size = 0x4, offset = 0x4, fixed_abs, tag = 'smem constant byte address 0x4 - core index']
  #allocation1 [shape = 'u32[144,128]{1,0:T(1,128)}', space=vmem, size = 0x12000, scoped, tag = 'internal scratch']
  %s0 = inlined_call_operand.vmem [shape: f32[8,16], index: 0, kind: input, shape index: {}]
  %s1 = inlined_call_operand.hbm [shape: f32[16,32], index: 1, kind: input, shape index: {}]
  %s2 = inlined_call_operand.vmem [shape: f32[1,32], index: 2, kind: input, shape index: {}]
  %s3 = inlined_call_operand.vmem [shape: f32[32,32], index: 3, kind: input, shape index: {}]
  %s4 = inlined_call_operand.hbm [shape: f32[1,32], index: 4, kind: input, shape index: {}]
  %s5 = inlined_call_operand.vmem [shape: f32[32,8], index: 5, kind: input, shape index: {}]
  %s6 = inlined_call_operand.vmem [shape: f32[1,8], index: 6, kind: input, shape index: {}]
  %s7 = inlined_call_operand.hbm [shape: f32[8,8], index: 7, kind: output, shape index: {}]
  %s8 = sld [smem:[#allocation0]]
  $region46: #{tpu_custom_call.1} parent=0
    _
  %s10 = ssub.s32 1, %s8
  %s11 = scalar_select 0, %s10, %s8
  $region1: #{tpu_custom_call.1} parent=0
    #allocation2 [shape = 'u8[8192]{0}', space=vmem, size = 0x2000, scoped, tag = 'input window, operand 1, single buffered']
    #allocation3 [shape = 's32[1]{0}', space=sflag, size = 0x4, scoped, tag = 'scoped memory for tpu_custom_call.1']
    #allocation4 [shape = 's32[1]{0}', space=sflag, size = 0x4, scoped, tag = 'scoped memory for tpu_custom_call.1']
    #allocation5 [shape = 'u8[512]{0}', space=vmem, size = 0x400, scoped, tag = 'input window, operand 4, single buffered']
    #allocation6 [shape = 's32[1]{0}', space=sflag, size = 0x4, scoped, tag = 'scoped memory for tpu_custom_call.1']
    #allocation7 [shape = 'u8[4096]{0}', space=vmem, size = 0x1000, scoped, tag = 'output window, operand 0, single buffered']
    %12 = vsyncpa [#allocation3], 0
    %13 = vsyncpa [#allocation6], 0
    %14 = vsyncpa [#allocation4], 0
    // Predicated region
    $region2: #{tpu_custom_call.1} parent=1 // pred_check
      _
    $region3: #{tpu_custom_call.1} parent=1 // pred_check_branch
      %16 = sbr.rel (0) target = $region5
    $region4: #{tpu_custom_call.1} parent=1 // pred_region
      _
    $region5: #{tpu_custom_call.1} parent=1 // pred_fallthru
      _
    // Predicated region
    $region6: #{tpu_custom_call.1} parent=1 // pred_check
      _
    $region7: #{tpu_custom_call.1} parent=1 // pred_check_branch
      %18 = sbr.rel (0) target = $region9
    $region8: #{tpu_custom_call.1} parent=1 // pred_region
      %s20 = ssub.s32 256, 256
      %21 = vsyncadd [#allocation3], %s20
      %s22 = sshll.u32 [#allocation2], 4
      %s23 = int_to_ptr.vmem [resolvable:$true] %s22
      %28 = dma.hbm_to_vmem [thread:$0]  %s1, 256, %s23, [#allocation3], 128, 128, 8
    $region9: #{tpu_custom_call.1} parent=1 // pred_fallthru
      _
    // Predicated region
    $region10: #{tpu_custom_call.1} parent=1 // pred_check
      _
    $region11: #{tpu_custom_call.1} parent=1 // pred_check_branch
      %30 = sbr.rel (0) target = $region13
    $region12: #{tpu_custom_call.1} parent=1 // pred_region
      _
    $region13: #{tpu_custom_call.1} parent=1 // pred_fallthru
      _
    // Predicated region
    $region14: #{tpu_custom_call.1} parent=1 // pred_check
      _
    $region15: #{tpu_custom_call.1} parent=1 // pred_check_branch
      %32 = sbr.rel (0) target = $region17
    $region16: #{tpu_custom_call.1} parent=1 // pred_region
      _
    $region17: #{tpu_custom_call.1} parent=1 // pred_fallthru
      _
    // Predicated region
    $region18: #{tpu_custom_call.1} parent=1 // pred_check
      _
    $region19: #{tpu_custom_call.1} parent=1 // pred_check_branch
      %34 = sbr.rel (0) target = $region21
    $region20: #{tpu_custom_call.1} parent=1 // pred_region
      %s36 = ssub.s32 16, 16
      %37 = vsyncadd [#allocation6], %s36
      %s39 = sshll.u32 [#allocation5], 4
      %s40 = int_to_ptr.vmem [resolvable:$true] %s39
      %42 = dma.hbm_to_vmem [thread:$0]  %s4, 16, %s40, [#allocation6]
    $region21: #{tpu_custom_call.1} parent=1 // pred_fallthru
      _
    // Predicated region
    $region22: #{tpu_custom_call.1} parent=1 // pred_check
      _
    $region23: #{tpu_custom_call.1} parent=1 // pred_check_branch
      %44 = sbr.rel (0) target = $region25
    $region24: #{tpu_custom_call.1} parent=1 // pred_region
      _
    $region25: #{tpu_custom_call.1} parent=1 // pred_fallthru
      _
    // Predicated region
    $region26: #{tpu_custom_call.1} parent=1 // pred_check
      _
    $region27: #{tpu_custom_call.1} parent=1 // pred_check_branch
      %46 = sbr.rel (0) target = $region29
    $region28: #{tpu_custom_call.1} parent=1 // pred_region
      _
    $region29: #{tpu_custom_call.1} parent=1 // pred_fallthru
      _
    // Predicated region
    $region30: #{tpu_custom_call.1} parent=1 // pred_check
      _
    $region31: #{tpu_custom_call.1} parent=1 // pred_check_branch
      %48 = sbr.rel (0) target = $region33
    $region32: #{tpu_custom_call.1} parent=1 // pred_region
      %49 = dma.done [#allocation3], 256
    $region33: #{tpu_custom_call.1} parent=1 // pred_fallthru
      _
    // Predicated region
    $region34: #{tpu_custom_call.1} parent=1 // pred_check
      _
    $region35: #{tpu_custom_call.1} parent=1 // pred_check_branch
      %51 = sbr.rel (0) target = $region37
    $region36: #{tpu_custom_call.1} parent=1 // pred_region
      %52 = dma.done [#allocation6], 16
    $region37: #{tpu_custom_call.1} parent=1 // pred_fallthru
      _
    %v53 = vld [vmem:[%s0] sm:$0xff]
    %v54 = vld [vmem:[#allocation2] sm:$0xff]
    %v55 = vld [vmem:[#allocation2 + $0x8] sm:$0xff]
    %v56 = vld [vmem:[%s2] sm:$0x1]
    %v58 = vlaneseq
    %v59 = vshrl.u32 %v58, 7
    %v60 = vsub.s32 0, %v59
    %v61 = vrot.slane %v56, %v60
    %vm63 = vcmask 130048
    %v65 = vsel %vm63, %v53, 0
    %67 = vmatprep.subr.mxu0 0.0
    %68 = vmatpush1.msra.mxu0 0.0
    %69 = vmatprep.subr.mxu0 0.0
    %70 = vmatpush1.msra.mxu0 0.0
    %71 = vmatprep.subr.mxu0 0.0
    %72 = vmatpush1.msra.mxu0 0.0
    %73 = vmatprep.subr.mxu0 0.0
    %74 = vmatpush1.msra.mxu0 0.0
    %75 = vmatprep.subr.mxu0 0.0
    %76 = vmatpush1.msra.mxu0 0.0
    %77 = vmatprep.subr.mxu0 0.0
    %78 = vmatpush1.msra.mxu0 0.0
    %79 = vmatprep.subr.mxu0 0.0
    %80 = vmatpush1.msra.mxu0 0.0
    %81 = vmatprep.subr.mxu0 0.0
    %82 = vmatpush1.msra.mxu0 0.0
    %83 = vmatprep.subr.mxu0 0.0
    %84 = vmatpush1.msra.mxu0 0.0
    %85 = vmatprep.subr.mxu0 0.0
    %86 = vmatpush1.msra.mxu0 0.0
    %87 = vmatprep.subr.mxu0 0.0
    %88 = vmatpush1.msra.mxu0 0.0
    %89 = vmatprep.subr.mxu0 0.0
    %90 = vmatpush1.msra.mxu0 0.0
    %91 = vmatprep.subr.mxu0 0.0
    %92 = vmatpush1.msra.mxu0 0.0
    %93 = vmatprep.subr.mxu0 0.0
    %94 = vmatpush1.msra.mxu0 0.0
    %95 = vmatprep.subr.mxu0 0.0
    %96 = vmatpush1.msra.mxu0 %v55
    %97 = vmatprep.subr.mxu0 0.0
    %98 = vmatpush1.msra.mxu0 %v54
    %99 = vmatprep.subr.mxu0 0.0
    %100 = vmatpush2.msra.mxu0 0.0
    %101 = vmatprep.subr.mxu0 0.0
    %102 = vmatpush2.msra.mxu0 0.0
    %103 = vmatprep.subr.mxu0 0.0
    %104 = vmatpush2.msra.mxu0 0.0
    %105 = vmatprep.subr.mxu0 0.0
    %106 = vmatpush2.msra.mxu0 0.0
    %107 = vmatprep.subr.mxu0 0.0
    %108 = vmatpush2.msra.mxu0 0.0
    %109 = vmatprep.subr.mxu0 0.0
    %110 = vmatpush2.msra.mxu0 0.0
    %111 = vmatprep.subr.mxu0 0.0
    %112 = vmatpush2.msra.mxu0 0.0
    %113 = vmatprep.subr.mxu0 0.0
    %114 = vmatpush2.msra.mxu0 0.0
    %115 = vmatprep.subr.mxu0 0.0
    %116 = vmatpush2.msra.mxu0 0.0
    %117 = vmatprep.subr.mxu0 0.0
    %118 = vmatpush2.msra.mxu0 0.0
    %119 = vmatprep.subr.mxu0 0.0
    %120 = vmatpush2.msra.mxu0 0.0
    %121 = vmatprep.subr.mxu0 0.0
    %122 = vmatpush2.msra.mxu0 0.0
    %123 = vmatprep.subr.mxu0 0.0
    %124 = vmatpush2.msra.mxu0 0.0
    %125 = vmatprep.subr.mxu0 0.0
    %126 = vmatpush2.msra.mxu0 0.0
    %127 = vmatprep.subr.mxu0 0.0
    %128 = vmatpush2.msra.mxu0 0.0
    %129 = vmatprep.subr.mxu0 0.0
    %130 = vmatpush2.msra.mxu0 0.0
    %131 = vmatprep.mubr.f32.mxu0 0.0
    %132 = vmatmul.mubr.f32.gmra.mxu0 %v65
    %v133 = vpop.f32.mrf.mxu0
    %v134 = vadd.f32 %v61, %v133
    %v135 = vpop.f32.mrf.mxu0
    %136 = vdwg.mxu0
    %v137 = vmax.f32 %v134, 0.0
    %v138 = vld [vmem:[%s3] sm:$0xff]
    %v139 = vld [vmem:[%s3 + $0x8] sm:$0xff]
    %v140 = vld [vmem:[%s3 + $0x10] sm:$0xff]
    %v141 = vld [vmem:[%s3 + $0x18] sm:$0xff]
    %v142 = vld [vmem:[#allocation5] sm:$0x1]
    %v144 = vlaneseq
    %v145 = vshrl.u32 %v144, 7
    %v146 = vsub.s32 0, %v145
    %v147 = vrot.slane %v142, %v146
    %vm149 = vcmask 261120
    %v151 = vsel %vm149, %v137, 0
    %153 = vmatprep.subr.mxu0 0.0
    %154 = vmatpush1.msra.mxu0 0.0
    %155 = vmatprep.subr.mxu0 0.0
    %156 = vmatpush1.msra.mxu0 0.0
    %157 = vmatprep.subr.mxu0 0.0
    %158 = vmatpush1.msra.mxu0 0.0
    %159 = vmatprep.subr.mxu0 0.0
    %160 = vmatpush1.msra.mxu0 0.0
    %161 = vmatprep.subr.mxu0 0.0
    %162 = vmatpush1.msra.mxu0 0.0
    %163 = vmatprep.subr.mxu0 0.0
    %164 = vmatpush1.msra.mxu0 0.0
    %165 = vmatprep.subr.mxu0 0.0
    %166 = vmatpush1.msra.mxu0 0.0
    %167 = vmatprep.subr.mxu0 0.0
    %168 = vmatpush1.msra.mxu0 0.0
    %169 = vmatprep.subr.mxu0 0.0
    %170 = vmatpush1.msra.mxu0 0.0
    %171 = vmatprep.subr.mxu0 0.0
    %172 = vmatpush1.msra.mxu0 0.0
    %173 = vmatprep.subr.mxu0 0.0
    %174 = vmatpush1.msra.mxu0 0.0
    %175 = vmatprep.subr.mxu0 0.0
    %176 = vmatpush1.msra.mxu0 0.0
    %177 = vmatprep.subr.mxu0 0.0
    %178 = vmatpush1.msra.mxu0 %v141
    %179 = vmatprep.subr.mxu0 0.0
    %180 = vmatpush1.msra.mxu0 %v140
    %181 = vmatprep.subr.mxu0 0.0
    %182 = vmatpush1.msra.mxu0 %v139
    %183 = vmatprep.subr.mxu0 0.0
    %184 = vmatpush1.msra.mxu0 %v138
    %185 = vmatprep.subr.mxu0 0.0
    %186 = vmatpush2.msra.mxu0 0.0
    %187 = vmatprep.subr.mxu0 0.0
    %188 = vmatpush2.msra.mxu0 0.0
    %189 = vmatprep.subr.mxu0 0.0
    %190 = vmatpush2.msra.mxu0 0.0
    %191 = vmatprep.subr.mxu0 0.0
    %192 = vmatpush2.msra.mxu0 0.0
    %193 = vmatprep.subr.mxu0 0.0
    %194 = vmatpush2.msra.mxu0 0.0
    %195 = vmatprep.subr.mxu0 0.0
    %196 = vmatpush2.msra.mxu0 0.0
    %197 = vmatprep.subr.mxu0 0.0
    %198 = vmatpush2.msra.mxu0 0.0
    %199 = vmatprep.subr.mxu0 0.0
    %200 = vmatpush2.msra.mxu0 0.0
    %201 = vmatprep.subr.mxu0 0.0
    %202 = vmatpush2.msra.mxu0 0.0
    %203 = vmatprep.subr.mxu0 0.0
    %204 = vmatpush2.msra.mxu0 0.0
    %205 = vmatprep.subr.mxu0 0.0
    %206 = vmatpush2.msra.mxu0 0.0
    %207 = vmatprep.subr.mxu0 0.0
    %208 = vmatpush2.msra.mxu0 0.0
    %209 = vmatprep.subr.mxu0 0.0
    %210 = vmatpush2.msra.mxu0 0.0
    %211 = vmatprep.subr.mxu0 0.0
    %212 = vmatpush2.msra.mxu0 0.0
    %213 = vmatprep.subr.mxu0 0.0
    %214 = vmatpush2.msra.mxu0 0.0
    %215 = vmatprep.subr.mxu0 0.0
    %216 = vmatpush2.msra.mxu0 0.0
    %217 = vmatprep.mubr.f32.mxu0 0.0
    %218 = vmatmul.mubr.f32.gmra.mxu0 %v151
    %v219 = vpop.f32.mrf.mxu0
    %v220 = vadd.f32 %v147, %v219
    %v221 = vpop.f32.mrf.mxu0
    %222 = vdwg.mxu0
    %v223 = vmax.f32 %v220, 0.0
    %v224 = vld [vmem:[%s5] sm:$0xff]
    %v225 = vld [vmem:[%s5 + $0x8] sm:$0xff]
    %v226 = vld [vmem:[%s5 + $0x10] sm:$0xff]
    %v227 = vld [vmem:[%s5 + $0x18] sm:$0xff]
    %v228 = vld [vmem:[%s6] sm:$0x1]
    %v230 = vlaneseq
    %v231 = vshrl.u32 %v230, 7
    %v232 = vsub.s32 0, %v231
    %v233 = vrot.slane %v228, %v232
    %v236 = vsel %vm149, %v223, 0
    %238 = vmatprep.subr.mxu0 0.0
    %239 = vmatpush1.msra.mxu0 0.0
    %240 = vmatprep.subr.mxu0 0.0
    %241 = vmatpush1.msra.mxu0 0.0
    %242 = vmatprep.subr.mxu0 0.0
    %243 = vmatpush1.msra.mxu0 0.0
    %244 = vmatprep.subr.mxu0 0.0
    %245 = vmatpush1.msra.mxu0 0.0
    %246 = vmatprep.subr.mxu0 0.0
    %247 = vmatpush1.msra.mxu0 0.0
    %248 = vmatprep.subr.mxu0 0.0
    %249 = vmatpush1.msra.mxu0 0.0
    %250 = vmatprep.subr.mxu0 0.0
    %251 = vmatpush1.msra.mxu0 0.0
    %252 = vmatprep.subr.mxu0 0.0
    %253 = vmatpush1.msra.mxu0 0.0
    %254 = vmatprep.subr.mxu0 0.0
    %255 = vmatpush1.msra.mxu0 0.0
    %256 = vmatprep.subr.mxu0 0.0
    %257 = vmatpush1.msra.mxu0 0.0
    %258 = vmatprep.subr.mxu0 0.0
    %259 = vmatpush1.msra.mxu0 0.0
    %260 = vmatprep.subr.mxu0 0.0
    %261 = vmatpush1.msra.mxu0 0.0
    %262 = vmatprep.subr.mxu0 0.0
    %263 = vmatpush1.msra.mxu0 %v227
    %264 = vmatprep.subr.mxu0 0.0
    %265 = vmatpush1.msra.mxu0 %v226
    %266 = vmatprep.subr.mxu0 0.0
    %267 = vmatpush1.msra.mxu0 %v225
    %268 = vmatprep.subr.mxu0 0.0
    %269 = vmatpush1.msra.mxu0 %v224
    %270 = vmatprep.subr.mxu0 0.0
    %271 = vmatpush2.msra.mxu0 0.0
    %272 = vmatprep.subr.mxu0 0.0
    %273 = vmatpush2.msra.mxu0 0.0
    %274 = vmatprep.subr.mxu0 0.0
    %275 = vmatpush2.msra.mxu0 0.0
    %276 = vmatprep.subr.mxu0 0.0
    %277 = vmatpush2.msra.mxu0 0.0
    %278 = vmatprep.subr.mxu0 0.0
    %279 = vmatpush2.msra.mxu0 0.0
    %280 = vmatprep.subr.mxu0 0.0
    %281 = vmatpush2.msra.mxu0 0.0
    %282 = vmatprep.subr.mxu0 0.0
    %283 = vmatpush2.msra.mxu0 0.0
    %284 = vmatprep.subr.mxu0 0.0
    %285 = vmatpush2.msra.mxu0 0.0
    %286 = vmatprep.subr.mxu0 0.0
    %287 = vmatpush2.msra.mxu0 0.0
    %288 = vmatprep.subr.mxu0 0.0
    %289 = vmatpush2.msra.mxu0 0.0
    %290 = vmatprep.subr.mxu0 0.0
    %291 = vmatpush2.msra.mxu0 0.0
    %292 = vmatprep.subr.mxu0 0.0
    %293 = vmatpush2.msra.mxu0 0.0
    %294 = vmatprep.subr.mxu0 0.0
    %295 = vmatpush2.msra.mxu0 0.0
    %296 = vmatprep.subr.mxu0 0.0
    %297 = vmatpush2.msra.mxu0 0.0
    %298 = vmatprep.subr.mxu0 0.0
    %299 = vmatpush2.msra.mxu0 0.0
    %300 = vmatprep.subr.mxu0 0.0
    %301 = vmatpush2.msra.mxu0 0.0
    %302 = vmatprep.mubr.f32.mxu0 0.0
    %303 = vmatmul.mubr.f32.gmra.mxu0 %v236
    %v304 = vpop.f32.mrf.mxu0
    %v305 = vadd.f32 %v233, %v304
    %v306 = vpop.f32.mrf.mxu0
    %307 = vdwg.mxu0
    %vm308 = vcmask 64512
    %309 = vst.msk [vmem:[#allocation7] sm:$0xff] %vm308, %v305
    // Predicated region
    $region38: #{tpu_custom_call.1} parent=1 // pred_check
      _
    $region39: #{tpu_custom_call.1} parent=1 // pred_check_branch
      %311 = sbr.rel (0) target = $region41
    $region40: #{tpu_custom_call.1} parent=1 // pred_region
      %s313 = ssub.s32 128, 128
      %314 = vsyncadd [#allocation4], %s313
      %s316 = sshll.u32 [#allocation7], 4
      %s317 = int_to_ptr.vmem [resolvable:$true] %s316
      %319 = dma.vmem_to_hbm [thread:$0]  %s317, 128, %s7, [#allocation4]
    $region41: #{tpu_custom_call.1} parent=1 // pred_fallthru
      _
    // Predicated region
    $region42: #{tpu_custom_call.1} parent=1 // pred_check
      _
    $region43: #{tpu_custom_call.1} parent=1 // pred_check_branch
      %321 = sbr.rel (0) target = $region45
    $region44: #{tpu_custom_call.1} parent=1 // pred_region
      %322 = dma.done [#allocation4], 128
    $region45: #{tpu_custom_call.1} parent=1 // pred_fallthru
      _
    %323 = vsyncpa [#allocation3], 1
    %324 = vsyncpa [#allocation6], 1
    %325 = vsyncpa [#allocation4], 1

</llo_original>
